<compile_context>
chip_gen: v6e
topology: v6e:2x2x1
jax: 0.10.0
libtpu: 0.0.40
codegen_flags: <defaults>
</compile_context>

<pallas_src>
import jax
import jax.numpy as jnp
from jax.experimental import pallas as pl
from jax.experimental.pallas import tpu as pltpu

_LANE = 128
_SUBLANE = 8
_DENSE_QUANTUM = 1024  # tb % 1024 == 0 keeps (tb//128, 128) output blocks (8,128)-aligned


def _round_up(x, m):
    return -(-x // m) * m


def _binary_classifier_kernel(x_ref, w_ref, b_ref, o_ref):
    # x_ref: (tb, D) f32 VMEM    batch tile of activations
    # w_ref: (D, 1)  f32 VMEM    resident weight column (constant index_map)
    # b_ref: (1,)    f32 SMEM    scalar bias
    # o_ref: (tb//128, 128) f32 VMEM (lane-dense) or (tb, 1) f32 VMEM (fallback)
    #
    # MXU matvec; the cross-lane jnp.sum it replaces would rival the per-tile
    # DMA time on v6e/v7x while the MXU sits idle.
    z = jnp.dot(x_ref[...], w_ref[...], preferred_element_type=jnp.float32)
    # Lane-dense epilogue: relayout the (tb, 1) logit column into the output
    # block's shape so the bias add / sigmoid / store run on dense vregs.
    # (No-op when o_ref is the (tb, 1) fallback output.)
    z = z.reshape(o_ref.shape)
    o_ref[...] = jax.nn.sigmoid(z + b_ref[0]).astype(o_ref.dtype)


def _vmem_capacity_bytes():
    try:
        return int(pltpu.get_tpu_info().vmem_capacity_bytes)
    except Exception:
        return 64 * 1024 * 1024  # v7x per-core physical VMEM; safe lower bound everywhere


def _pick_batch_tile(batch, d, vmem_cap, dense):
    """Largest batch-row tile whose double-buffered footprint fits ~half of VMEM."""
    lane_d = _round_up(max(d, 1), _LANE)
    # Resident (D, 1) weight block is lane-padded to 128 and double-buffered.
    w_bytes = 2 * 4 * _round_up(max(d, 1), _SUBLANE) * _LANE
    budget = vmem_cap // 2 - w_bytes                 # remainder left as compiler headroom
    out_row = 2 * 4 * (1 if dense else _LANE)        # dense rows vs lane-padded column
    per_row = 2 * 4 * lane_d + out_row               # x (2 bufs) + out (2 bufs)
    rows = max(budget, 0) // per_row
    quantum = _DENSE_QUANTUM if dense else _SUBLANE
    return int((min(rows, batch) // quantum) * quantum)


def _forward_call(x, w_col, b, *, tb, grid, dense, vmem_cap):
    batch, d = x.shape
    rows_out = grid * tb
    if dense:
        out_shape = jax.ShapeDtypeStruct((rows_out // _LANE, _LANE), jnp.float32)
        out_spec = pl.BlockSpec((tb // _LANE, _LANE), lambda i: (i, 0))
    else:
        out_shape = jax.ShapeDtypeStruct((rows_out, 1), jnp.float32)
        out_spec = pl.BlockSpec((tb, 1), lambda i: (i, 0))

    out = pl.pallas_call(
        _binary_classifier_kernel,
        out_shape=out_shape,
        grid=(grid,),
        in_specs=[
            pl.BlockSpec((tb, d), lambda i: (i, 0)),             # batch-tiled activations
            pl.BlockSpec((d, 1), lambda i: (0, 0)),              # resident weight column
            pl.BlockSpec(memory_space=pltpu.MemorySpace.SMEM),   # scalar bias
        ],
        out_specs=out_spec,
        compiler_params=pltpu.CompilerParams(
            # "parallel" lets the runtime shard the batch grid over v7x's two
            # TensorCores; harmless on single-core v5e/v6e.
            # TODO(synk): evaluate pltpu.CORE_PARALLEL on v7x for a guaranteed 2-TC split.
            dimension_semantics=("parallel",),
            vmem_limit_bytes=(vmem_cap * 3) // 4,
        ),
        cost_estimate=pl.CostEstimate(
            flops=2 * rows_out * d,
            transcendentals=rows_out,                  # ~one exp per row (sigmoid)
            bytes_accessed=4 * (min(rows_out, batch) * d + d + rows_out),
        ),
    )(x, w_col, b)
    out = out.reshape(rows_out, 1) if dense else out
    return out[:batch]


def binary_classifier_forward(x, weight, bias):
    """sigmoid(x @ weight.T + bias).

    x: (B, D) f32; weight: (1, D) f32 (PyTorch nn.Linear layout); bias: (1,) f32.
    Returns (B, 1) f32.
    """
    x = jnp.asarray(x, jnp.float32)
    batch, d = x.shape
    w_col = jnp.asarray(weight, jnp.float32).reshape(d, 1)   # (1, D) -> (D, 1), tiny
    b = jnp.asarray(bias, jnp.float32).reshape(1)
    vmem_cap = _vmem_capacity_bytes()

    if batch < _DENSE_QUANTUM:
        # Small batch: one full-array block, no tiling / alignment games.
        return _forward_call(x, w_col, b, tb=batch, grid=1, dense=False,
                             vmem_cap=vmem_cap)

    tb = _pick_batch_tile(batch, d, vmem_cap, dense=True)
    if tb >= _DENSE_QUANTUM:
        try:
            return _forward_call(x, w_col, b, tb=tb, grid=pl.cdiv(batch, tb),
                                 dense=True, vmem_cap=vmem_cap)
        except Exception:
            pass  # fall through to the lane-sparse column output below

    # Fallback: tiled column output (used if the dense relayout does not lower
    # on this toolchain, or if D is so large that a 1024-row tile misses VMEM).
    # TODO(synk): add a feature-dim grid axis + f32 accumulator (and the D<128
    # row-packing trick) for feature dims where even small tiles are wasteful.
    tb = max(_SUBLANE, _pick_batch_tile(batch, d, vmem_cap, dense=False))
    return _forward_call(x, w_col, b, tb=tb, grid=pl.cdiv(batch, tb),
                         dense=False, vmem_cap=vmem_cap)


def init_params(input_dim, key):
    """nn.Linear default init: U(-1/sqrt(D), 1/sqrt(D)); PyTorch weight layout (1, D)."""
    kw, kb = jax.random.split(key)
    bound = 1.0 / jnp.sqrt(jnp.float32(input_dim))
    weight = jax.random.uniform(kw, (1, input_dim), jnp.float32, -bound, bound)
    bias = jax.random.uniform(kb, (1,), jnp.float32, -bound, bound)
    return weight, bias


def reference_forward(x, weight, bias):
    # Pure element-wise f32 reference (no MXU precision ambiguity).
    return jax.nn.sigmoid(jnp.sum(x * weight, axis=-1, keepdims=True) + bias)


if __name__ == "__main__":
    key = jax.random.PRNGKey(0)
    k1, k2, k3, kp = jax.random.split(key, 4)

    input_dim = 32
    weight, bias = init_params(input_dim, kp)

    cases = [
        ("small_aligned", jax.random.normal(k1, (8, input_dim), jnp.float32)),
        ("small_ragged", jax.random.normal(k2, (13, input_dim), jnp.float32)),
        # Exercises the batch-tiled lane-dense path with a ragged last block.
        ("tiled_ragged", jax.random.normal(k3, (2200, input_dim), jnp.float32)),
    ]
    for name, xs in cases:
        out = jax.block_until_ready(binary_classifier_forward(xs, weight, bias))
        ref = reference_forward(xs, weight, bias)
        assert out.shape == (xs.shape[0], 1), (name, out.shape)
        err = float(jnp.max(jnp.abs(out - ref)))
        assert err < 1e-4, (name, err)
    print("KERNEL_OK")
</pallas_src>

<mosaic_0001>
module attributes {stable_mosaic.version = 11 : i64} {
  func.func @_binary_classifier_kernel(%arg0: i32, %arg1: memref<8x32xf32, #tpu.memory_space<vmem>>, %arg2: memref<32x1xf32, #tpu.memory_space<vmem>>, %arg3: memref<1xf32, #tpu.memory_space<smem>>, %arg4: memref<8x1xf32, #tpu.memory_space<vmem>>) attributes {dimension_semantics = [#tpu.dimension_semantics<parallel>], iteration_bounds = array<i64: 1>, scalar_prefetch = 0 : i64, scratch_operands = 0 : i64, tpu.core_type = #tpu.core_type<tc>, window_params = [{transform_indices = @transform_0, window_bounds = array<i64: 8, 32>}, {pipeline_mode = #tpu.pipeline_mode<synchronous>, transform_indices = @transform_1, window_bounds = array<i64: 32, 1>}, {transform_indices = @transform_2, window_bounds = array<i64: 1>}, {transform_indices = @transform_3, window_bounds = array<i64: 8, 1>}]} {
    %c0 = arith.constant 0 : index
    %c0_0 = arith.constant 0 : index
    %0 = vector.load %arg1[%c0, %c0_0] : memref<8x32xf32, #tpu.memory_space<vmem>>, vector<8x32xf32>
    %c0_1 = arith.constant 0 : index
    %c0_2 = arith.constant 0 : index
    %1 = vector.load %arg2[%c0_1, %c0_2] : memref<32x1xf32, #tpu.memory_space<vmem>>, vector<32x1xf32>
    %cst = arith.constant dense<0.000000e+00> : vector<8x1xf32>
    %2 = tpu.matmul %0, %1, %cst {dimension_numbers = #tpu.dot_dimension_numbers<[1], [0], [0], [1], [0, 0, 1, 1], [], []>} : vector<8x32xf32>, vector<32x1xf32>, vector<8x1xf32> -> vector<8x1xf32>
    %c0_3 = arith.constant 0 : index
    %3 = memref.load %arg3[%c0_3] : memref<1xf32, #tpu.memory_space<smem>>
    %4 = vector.broadcast %3 : f32 to vector<8x1xf32>
    %5 = arith.addf %2, %4 : vector<8x1xf32>
    %6 = arith.negf %5 : vector<8x1xf32>
    %7 = math.exp %6 : vector<8x1xf32>
    %cst_4 = arith.constant 1.000000e+00 : f32
    %8 = vector.broadcast %cst_4 : f32 to vector<8x1xf32>
    %9 = arith.addf %8, %7 : vector<8x1xf32>
    %10 = arith.divf %8, %9 : vector<8x1xf32>
    %c0_5 = arith.constant 0 : index
    %c0_6 = arith.constant 0 : index
    %11 = vector.load %arg4[%c0_5, %c0_6] : memref<8x1xf32, #tpu.memory_space<vmem>>, vector<8x1xf32>
    tpu.vector_store %arg4[%c0_5, %c0_6], %10 {strides = array<i32>} : memref<8x1xf32, #tpu.memory_space<vmem>>, vector<8x1xf32>,
    return
  }
  func.func @transform_0(%arg0: i32) -> (i32, i32) {
    %c0_i32 = arith.constant 0 : i32
    %c0_i32_0 = arith.constant 0 : i32
    return %arg0, %c0_i32 : i32, i32
  }
  func.func @transform_1(%arg0: i32) -> (i32, i32) {
    %c0_i32 = arith.constant 0 : i32
    %c0_i32_0 = arith.constant 0 : i32
    %c0_i32_1 = arith.constant 0 : i32
    return %c0_i32, %c0_i32_0 : i32, i32
  }
  func.func @transform_2(%arg0: i32) -> i32 {
    %c0_i32 = arith.constant 0 : i32
    %c0_i32_0 = arith.constant 0 : i32
    return %c0_i32 : i32
  }
  func.func @transform_3(%arg0: i32) -> (i32, i32) {
    %c0_i32 = arith.constant 0 : i32
    %c0_i32_0 = arith.constant 0 : i32
    return %arg0, %c0_i32 : i32, i32
  }
}

</mosaic_0001>

<llo_original>
// kernel: tpu_custom_call.1
$region0: #{tpu_custom_call.1}
  #allocation0 [shape = 'u32[]', space=smem, size = 0x4, offset = 0x4, fixed_abs, tag = 'smem constant byte address 0x4 - core index']
  #allocation1 [shape = 'u32[144,128]{1,0:T(1,128)}', space=vmem, size = 0x12000, scoped, tag = 'internal scratch']
  #allocation2 [shape = 'f32[1]{0:T(128)S(6)}', space=smem, size = 0x200, scoped, tag = 'scoped memory for tpu_custom_call.1']
  %s0 = inlined_call_operand.vmem [shape: f32[8,32], index: 0, kind: input, shape index: {}]
  %s1 = inlined_call_operand.vmem [shape: f32[32,1], index: 1, kind: input, shape index: {}]
  %s2 = inlined_call_operand.<no memory space> [shape: f32[1], index: 2, kind: input, shape index: {}]
  %s3 = inlined_call_operand.vmem [shape: f32[8,1], index: 3, kind: output, shape index: {}]
  %s4 = sld [smem:[#allocation0]]
  $region22: #{tpu_custom_call.1} parent=0
    _
  %s6 = ssub.s32 1, %s4
  %s7 = scalar_select 0, %s6, %s4
  %8 = sst [smem:[#allocation2]] %s2
  // Predicated region
  $region2: #{tpu_custom_call.1} parent=0 // pred_check
    _
  $region3: #{tpu_custom_call.1} parent=0 // pred_check_branch
    %10 = sbr.rel (0) target = $region5
  $region4: #{tpu_custom_call.1} parent=0 // pred_region
    _
  $region5: #{tpu_custom_call.1} parent=0 // pred_fallthru
    _
  // Predicated region
  $region6: #{tpu_custom_call.1} parent=0 // pred_check
    _
  $region7: #{tpu_custom_call.1} parent=0 // pred_check_branch
    %12 = sbr.rel (0) target = $region9
  $region8: #{tpu_custom_call.1} parent=0 // pred_region
    _
  $region9: #{tpu_custom_call.1} parent=0 // pred_fallthru
    _
  // Predicated region
  $region10: #{tpu_custom_call.1} parent=0 // pred_check
    _
  $region11: #{tpu_custom_call.1} parent=0 // pred_check_branch
    %14 = sbr.rel (0) target = $region13
  $region12: #{tpu_custom_call.1} parent=0 // pred_region
    _
  $region13: #{tpu_custom_call.1} parent=0 // pred_fallthru
    _
  %v15 = vld [vmem:[%s0] sm:$0xff]
  %v16 = vld [vmem:[%s1] sm:$0xff]
  %v17 = vld [vmem:[%s1 + $0x8] sm:$0xff]
  %v18 = vld [vmem:[%s1 + $0x10] sm:$0xff]
  %v19 = vld [vmem:[%s1 + $0x18] sm:$0xff]
  %s20 = sld [smem:[#allocation2]]
  %v21 = vstv %s20
  %vm22 = vcmask 261120
  %v24 = vsel %vm22, %v15, 0
  %26 = vmatprep.subr.mxu0 0.0
  %27 = vmatpush1.msra.mxu0 0.0
  %28 = vmatprep.subr.mxu0 0.0
  %29 = vmatpush1.msra.mxu0 0.0
  %30 = vmatprep.subr.mxu0 0.0
  %31 = vmatpush1.msra.mxu0 0.0
  %32 = vmatprep.subr.mxu0 0.0
  %33 = vmatpush1.msra.mxu0 0.0
  %34 = vmatprep.subr.mxu0 0.0
  %35 = vmatpush1.msra.mxu0 0.0
  %36 = vmatprep.subr.mxu0 0.0
  %37 = vmatpush1.msra.mxu0 0.0
  %38 = vmatprep.subr.mxu0 0.0
  %39 = vmatpush1.msra.mxu0 0.0
  %40 = vmatprep.subr.mxu0 0.0
  %41 = vmatpush1.msra.mxu0 0.0
  %42 = vmatprep.subr.mxu0 0.0
  %43 = vmatpush1.msra.mxu0 0.0
  %44 = vmatprep.subr.mxu0 0.0
  %45 = vmatpush1.msra.mxu0 0.0
  %46 = vmatprep.subr.mxu0 0.0
  %47 = vmatpush1.msra.mxu0 0.0
  %48 = vmatprep.subr.mxu0 0.0
  %49 = vmatpush1.msra.mxu0 0.0
  %50 = vmatprep.subr.mxu0 0.0
  %51 = vmatpush1.msra.mxu0 %v19
  %52 = vmatprep.subr.mxu0 0.0
  %53 = vmatpush1.msra.mxu0 %v18
  %54 = vmatprep.subr.mxu0 0.0
  %55 = vmatpush1.msra.mxu0 %v17
  %56 = vmatprep.subr.mxu0 0.0
  %57 = vmatpush1.msra.mxu0 %v16
  %58 = vmatprep.subr.mxu0 0.0
  %59 = vmatpush2.msra.mxu0 0.0
  %60 = vmatprep.subr.mxu0 0.0
  %61 = vmatpush2.msra.mxu0 0.0
  %62 = vmatprep.subr.mxu0 0.0
  %63 = vmatpush2.msra.mxu0 0.0
  %64 = vmatprep.subr.mxu0 0.0
  %65 = vmatpush2.msra.mxu0 0.0
  %66 = vmatprep.subr.mxu0 0.0
  %67 = vmatpush2.msra.mxu0 0.0
  %68 = vmatprep.subr.mxu0 0.0
  %69 = vmatpush2.msra.mxu0 0.0
  %70 = vmatprep.subr.mxu0 0.0
  %71 = vmatpush2.msra.mxu0 0.0
  %72 = vmatprep.subr.mxu0 0.0
  %73 = vmatpush2.msra.mxu0 0.0
  %74 = vmatprep.subr.mxu0 0.0
  %75 = vmatpush2.msra.mxu0 0.0
  %76 = vmatprep.subr.mxu0 0.0
  %77 = vmatpush2.msra.mxu0 0.0
  %78 = vmatprep.subr.mxu0 0.0
  %79 = vmatpush2.msra.mxu0 0.0
  %80 = vmatprep.subr.mxu0 0.0
  %81 = vmatpush2.msra.mxu0 0.0
  %82 = vmatprep.subr.mxu0 0.0
  %83 = vmatpush2.msra.mxu0 0.0
  %84 = vmatprep.subr.mxu0 0.0
  %85 = vmatpush2.msra.mxu0 0.0
  %86 = vmatprep.subr.mxu0 0.0
  %87 = vmatpush2.msra.mxu0 0.0
  %88 = vmatprep.subr.mxu0 0.0
  %89 = vmatpush2.msra.mxu0 0.0
  %90 = vmatprep.mubr.f32.mxu0 0.0
  %91 = vmatmul.mubr.f32.gmra.mxu0 %v24
  %v92 = vpop.f32.mrf.mxu0
  %v93 = vadd.f32 %v21, %v92
  %v94 = vpop.f32.mrf.mxu0
  %95 = vdwg.mxu0
  %v96 = vxor.u32 %v93, 2147483648
  %v97 = vmul.f32 %v96, 1.442695
  %v98 = vpow.pop %v97
  %v99 = vadd.f32 %v98, 1.0
  %v100 = vrcp.pop %v99
  %v101 = vmul.f32 1.0, %v100
  %vm102 = vcmask 7168
  %103 = vst.msk [vmem:[%s3] sm:$0xff] %vm102, %v101
  // Predicated region
  $region14: #{tpu_custom_call.1} parent=0 // pred_check
    _
  $region15: #{tpu_custom_call.1} parent=0 // pred_check_branch
    %105 = sbr.rel (0) target = $region17
  $region16: #{tpu_custom_call.1} parent=0 // pred_region
    _
  $region17: #{tpu_custom_call.1} parent=0 // pred_fallthru
    _
  // Predicated region
  $region18: #{tpu_custom_call.1} parent=0 // pred_check
    _
  $region19: #{tpu_custom_call.1} parent=0 // pred_check_branch
    %107 = sbr.rel (0) target = $region21
  $region20: #{tpu_custom_call.1} parent=0 // pred_region
    _
  $region21: #{tpu_custom_call.1} parent=0 // pred_fallthru
    _

</llo_original>
